<compile_context>
chip_gen: v7x
topology: tpu7x:2x2x1
jax: 0.10.0
libtpu: 0.0.40
codegen_flags: <defaults>
</compile_context>

<pallas_src>
import functools

import jax
import jax.numpy as jnp
from jax import lax
from jax.experimental import pallas as pl
from jax.experimental.pallas import tpu as pltpu


def _round_up(x, m):
    return ((x + m - 1) // m) * m


def _sat_loss_kernel(coeff_ref, gathered_ref, efeat_ref, fn_idx_ref,
                     out_ref, acc_ref, *, eps, loss_sharpness, f_tile):
    """One (clause-tile, edge-tile) step of the SAT loss.

    coeff_ref   : SMEM (1,)      f32  scalar-prefetched min(step**alpha, max_coeff)
    gathered_ref: VMEM [1, E_t]  f32  variable_prediction[var_idx[e]] (gather hoisted)
    efeat_ref   : VMEM [1, E_t]  f32  edge feature (+/-1, 0 for padding)
    fn_idx_ref  : VMEM [1, E_t]  i32  clause index per edge (-1 for padding)
    out_ref     : VMEM [1, F_t]  f32  per-clause safe_log (written on last edge tile)
    acc_ref     : VMEM [2, F_t]  f32  scratch: row0 = nominator, row1 = denominator
    """
    fi = pl.program_id(0)
    ei = pl.program_id(1)

    @pl.when(ei == 0)
    def _init():
        acc_ref[...] = jnp.zeros_like(acc_ref)

    coeff = coeff_ref[0]
    e_tile = gathered_ref.shape[1]

    # --- lane-dense edge-wise math (VPU / EUP) ---
    efeat = efeat_ref[...]                                             # [1, E_t]
    edge_values = efeat * gathered_ref[...] + (1.0 - efeat) * 0.5      # [1, E_t]
    weights = jnp.exp(coeff * edge_values)                             # EUP
    wv = jnp.concatenate([weights * edge_values, weights], axis=0)     # [2, E_t]

    # --- exact clause one-hot restricted to this tile's clause window ---
    local_idx = fn_idx_ref[...] - fi * f_tile                          # [1, E_t]
    f_iota = lax.broadcasted_iota(jnp.int32, (f_tile, e_tile), 0)      # [F_t, E_t]
    onehot_ft = (f_iota == local_idx).astype(jnp.float32)              # [F_t, E_t]

    # Fused nominator/denominator segment sums: contract the edge (lane) dim of
    # both operands in a single MXU pass -> [2, F_t] accumulated in VMEM.
    acc_ref[...] += lax.dot_general(
        wv, onehot_ft, dimension_numbers=(((1,), (1,)), ((), ())),
        preferred_element_type=jnp.float32)

    @pl.when(ei == pl.num_programs(1) - 1)
    def _finalize():
        nominator = acc_ref[0:1, :]                                    # [1, F_t]
        denominator = acc_ref[1:2, :]
        clause_value = denominator / jnp.maximum(nominator, eps)
        clause_value = 1.0 + lax.integer_pow(clause_value - 1.0, loss_sharpness)
        # safe_log: clamp(x, min=0), max(., eps), log.  Padded clause lanes give
        # log(2); the wrapper slices them away before the mean.
        out_ref[...] = jnp.log(jnp.maximum(jnp.maximum(clause_value, 0.0), eps))


def sat_loss_evaluator(variable_prediction, graph_map, batch_variable_map,
                       batch_function_map, edge_feature, global_step,
                       *, alpha, eps, max_coeff, loss_sharpness,
                       e_tile_max=1024, f_tile_max=512):
    """JAX/Pallas equivalent of SatLossEvaluator.forward (degree_loss=None path)."""
    # TODO(synk): degree_loss is assumed None (the optional torch.sparse.mm branch
    # of the reference forward is skipped).
    del batch_variable_map  # only used for sizes in the reference module
    function_num = batch_function_map.shape[0]
    edge_num = graph_map.shape[1]

    # Clause tile ("parallel" grid axis -> shards across v7x's 2 TensorCores).
    f_tile = min(_round_up(f_tile_max, 128), _round_up(max(function_num, 1), 128))
    f_pad = _round_up(max(function_num, 1), f_tile)
    n_f_tiles = f_pad // f_tile

    # Edge tile: lane-aligned and sized so the in-kernel one-hot + iota
    # ([F_t, E_t] f32 + i32, ~2 MiB each) fit every generation's scoped-VMEM
    # default (v5e 16 MiB, v6e/v7x 32 MiB) with headroom for pipelined inputs.
    onehot_budget = 2 * 1024 * 1024
    e_tile_cap = max(128, (onehot_budget // (4 * f_tile)) // 128 * 128)
    e_tile = min(_round_up(e_tile_max, 128), e_tile_cap,
                 _round_up(max(edge_num, 1), 128))
    e_pad = _round_up(max(edge_num, 1), e_tile)
    n_e_tiles = e_pad // e_tile

    var_idx = graph_map[0].astype(jnp.int32)
    fn_idx = graph_map[1].astype(jnp.int32)

    # Hoisted O(E) variable gather (was an O(V*E) on-chip one-hot matmul).
    gathered = variable_prediction.reshape(-1).astype(jnp.float32)[var_idx]

    # Only O(E) padded lane-dense rows reach the kernel -- no dense masks.
    # Padded edges carry clause index -1 so they match no clause lane.
    gathered_row = jnp.zeros((1, e_pad), jnp.float32).at[0, :edge_num].set(gathered)
    efeat_row = jnp.zeros((1, e_pad), jnp.float32).at[0, :edge_num].set(
        edge_feature.reshape(-1).astype(jnp.float32))
    fn_idx_row = jnp.full((1, e_pad), -1, jnp.int32).at[0, :edge_num].set(fn_idx)

    coeff = jnp.minimum(
        jnp.asarray(global_step, jnp.float32) ** jnp.float32(alpha),
        jnp.float32(max_coeff)).reshape(1).astype(jnp.float32)

    kernel = functools.partial(
        _sat_loss_kernel, eps=float(eps), loss_sharpness=int(loss_sharpness),
        f_tile=int(f_tile))

    grid_spec = pltpu.PrefetchScalarGridSpec(
        num_scalar_prefetch=1,                       # coeff -> SMEM
        grid=(n_f_tiles, n_e_tiles),
        in_specs=[
            pl.BlockSpec((1, e_tile), lambda fi, ei, c: (0, ei)),   # gathered pred
            pl.BlockSpec((1, e_tile), lambda fi, ei, c: (0, ei)),   # edge feature
            pl.BlockSpec((1, e_tile), lambda fi, ei, c: (0, ei)),   # clause index
        ],
        out_specs=pl.BlockSpec((1, f_tile), lambda fi, ei, c: (0, fi)),
        scratch_shapes=[pltpu.VMEM((2, f_tile), jnp.float32)],
    )

    cost = pl.CostEstimate(
        flops=int(n_f_tiles * n_e_tiles * (4 * e_tile * f_tile + 8 * e_tile)
                  + 16 * f_pad),
        transcendentals=int(n_f_tiles * e_pad + f_pad),
        bytes_accessed=int(4 * (3 * e_pad * n_f_tiles + f_pad + 1)),
    )

    per_clause_log = pl.pallas_call(
        kernel,
        out_shape=jax.ShapeDtypeStruct((1, f_pad), jnp.float32),
        grid_spec=grid_spec,
        compiler_params=pltpu.CompilerParams(
            dimension_semantics=("parallel", "arbitrary")),
        cost_estimate=cost,
    )(coeff, gathered_row, efeat_row, fn_idx_row)

    return jnp.mean(per_clause_log[0, :function_num])


def _reference_loss(variable_prediction, graph_map, batch_function_map, edge_feature,
                    global_step, *, alpha, eps, max_coeff, loss_sharpness):
    """Pure-JAX reference mirroring the PyTorch forward, for verification."""
    var_idx = graph_map[0].astype(jnp.int32)
    fn_idx = graph_map[1].astype(jnp.int32)
    function_num = batch_function_map.shape[0]
    ef = edge_feature.reshape(-1).astype(jnp.float32)
    coeff = jnp.minimum(jnp.asarray(global_step, jnp.float32) ** jnp.float32(alpha),
                        jnp.float32(max_coeff))
    ev = ef * variable_prediction.reshape(-1)[var_idx] + (1.0 - ef) * 0.5
    w = jnp.exp(coeff * ev)
    nom = jnp.zeros((function_num,), jnp.float32).at[fn_idx].add(w * ev)
    den = jnp.zeros((function_num,), jnp.float32).at[fn_idx].add(w)
    cv = den / jnp.maximum(nom, eps)
    cv = 1.0 + lax.integer_pow(cv - 1.0, int(loss_sharpness))
    return jnp.mean(jnp.log(jnp.maximum(jnp.maximum(cv, 0.0), eps)))


if __name__ == "__main__":
    key = jax.random.PRNGKey(0)
    k1, k2, k3, k4 = jax.random.split(key, 4)

    # Small synthetic SAT problem: 2 problems in a batch, 40 variables,
    # 200 clauses, 700 literal edges.  f_tile_max=128 / e_tile_max=256 force a
    # 2 x 3 grid, exercising both the "parallel" clause axis and the edge
    # reduction (init / accumulate / finalize) path.
    variable_num, function_num, edge_num, batch = 40, 200, 700, 2

    variable_prediction = 0.05 + 0.9 * jax.random.uniform(
        k1, (variable_num, 1), jnp.float32)                         # sigmoid-like
    graph_map = jnp.stack([
        jax.random.randint(k2, (edge_num,), 0, variable_num),
        jax.random.randint(k3, (edge_num,), 0, function_num),
    ]).astype(jnp.int32)                                            # [2, E]
    edge_feature = (2.0 * jax.random.bernoulli(
        k4, 0.5, (edge_num, 1)).astype(jnp.float32) - 1.0)          # +/-1, [E, 1]
    batch_variable_map = (jnp.arange(variable_num) * batch // variable_num).astype(jnp.int32)
    batch_function_map = (jnp.arange(function_num) * batch // function_num).astype(jnp.int32)

    alpha = 0.4
    global_step = 10.0
    eps = 1e-8
    max_coeff = 10.0
    loss_sharpness = 10

    loss = sat_loss_evaluator(
        variable_prediction, graph_map, batch_variable_map, batch_function_map,
        edge_feature, global_step,
        alpha=alpha, eps=eps, max_coeff=max_coeff, loss_sharpness=loss_sharpness,
        e_tile_max=256, f_tile_max=128)
    loss = jax.block_until_ready(loss)

    ref = _reference_loss(
        variable_prediction, graph_map, batch_function_map, edge_feature, global_step,
        alpha=alpha, eps=eps, max_coeff=max_coeff, loss_sharpness=loss_sharpness)
    assert jnp.allclose(loss, ref, rtol=1e-4, atol=1e-5), (loss, ref)

    print("KERNEL_OK")
</pallas_src>

<mosaic_0001>
module attributes {stable_mosaic.version = 11 : i64} {
  func.func @_sat_loss_kernel(%arg0: i32, %arg1: i32, %arg2: memref<1xf32, #tpu.memory_space<smem>>, %arg3: memref<1x256xf32, #tpu.memory_space<vmem>>, %arg4: memref<1x256xf32, #tpu.memory_space<vmem>>, %arg5: memref<1x256xi32, #tpu.memory_space<vmem>>, %arg6: memref<1x128xf32, #tpu.memory_space<vmem>>, %arg7: memref<2x128xf32, #tpu.memory_space<vmem>>) attributes {dimension_semantics = [#tpu.dimension_semantics<parallel>, #tpu.dimension_semantics<arbitrary>], iteration_bounds = array<i64: 2, 3>, scalar_prefetch = 1 : i64, scratch_operands = 1 : i64, tpu.core_type = #tpu.core_type<tc>, window_params = [{transform_indices = @transform_0, window_bounds = array<i64: 1, 256>}, {transform_indices = @transform_1, window_bounds = array<i64: 1, 256>}, {transform_indices = @transform_2, window_bounds = array<i64: 1, 256>}, {transform_indices = @transform_3, window_bounds = array<i64: 1, 128>}]} {
    %c0_i32 = arith.constant 0 : i32
    %0 = arith.cmpi eq, %arg1, %c0_i32 : i32
    %1 = arith.extui %0 : i1 to i32
    %c0_i32_0 = arith.constant 0 : i32
    %2 = arith.cmpi ne, %1, %c0_i32_0 : i32
    scf.if %2 {
      %cst_14 = arith.constant 0.000000e+00 : f32
      %33 = vector.broadcast %cst_14 : f32 to vector<2x128xf32>
      %c0_15 = arith.constant 0 : index
      %c0_16 = arith.constant 0 : index
      %34 = vector.load %arg7[%c0_15, %c0_16] : memref<2x128xf32, #tpu.memory_space<vmem>>, vector<2x128xf32>
      tpu.vector_store %arg7[%c0_15, %c0_16], %33 {strides = array<i32>} : memref<2x128xf32, #tpu.memory_space<vmem>>, vector<2x128xf32>,
    } else {
    }
    %c0 = arith.constant 0 : index
    %3 = memref.load %arg2[%c0] : memref<1xf32, #tpu.memory_space<smem>>
    %c0_1 = arith.constant 0 : index
    %c0_2 = arith.constant 0 : index
    %4 = vector.load %arg4[%c0_1, %c0_2] : memref<1x256xf32, #tpu.memory_space<vmem>>, vector<1x256xf32>
    %c0_3 = arith.constant 0 : index
    %c0_4 = arith.constant 0 : index
    %5 = vector.load %arg3[%c0_3, %c0_4] : memref<1x256xf32, #tpu.memory_space<vmem>>, vector<1x256xf32>
    %6 = arith.mulf %4, %5 : vector<1x256xf32>
    %cst = arith.constant 1.000000e+00 : f32
    %7 = vector.broadcast %cst : f32 to vector<1x256xf32>
    %8 = arith.subf %7, %4 : vector<1x256xf32>
    %cst_5 = arith.constant 5.000000e-01 : f32
    %9 = vector.broadcast %cst_5 : f32 to vector<1x256xf32>
    %10 = arith.mulf %8, %9 : vector<1x256xf32>
    %11 = arith.addf %6, %10 : vector<1x256xf32>
    %12 = vector.broadcast %3 : f32 to vector<1x256xf32>
    %13 = arith.mulf %12, %11 : vector<1x256xf32>
    %14 = math.exp %13 : vector<1x256xf32>
    %15 = arith.mulf %14, %11 : vector<1x256xf32>
    %16 = tpu.concatenate %15, %14 in 0 : vector<1x256xf32>, vector<1x256xf32> -> vector<2x256xf32>
    %c0_6 = arith.constant 0 : index
    %c0_7 = arith.constant 0 : index
    %17 = vector.load %arg5[%c0_6, %c0_7] : memref<1x256xi32, #tpu.memory_space<vmem>>, vector<1x256xi32>
    %c128_i32 = arith.constant 128 : i32
    %18 = arith.muli %arg0, %c128_i32 : i32
    %19 = vector.broadcast %18 : i32 to vector<1x256xi32>
    %20 = arith.subi %17, %19 : vector<1x256xi32>
    %21 = tpu.iota {dimensions = array<i32: 0>} : vector<128x256xi32>
    %22 = vector.broadcast %20 : vector<1x256xi32> to vector<128x256xi32>
    %23 = arith.cmpi eq, %21, %22 : vector<128x256xi32>
    %24 = arith.extui %23 : vector<128x256xi1> to vector<128x256xi32>
    %25 = arith.sitofp %24 : vector<128x256xi32> to vector<128x256xf32>
    %c0_8 = arith.constant 0 : index
    %c0_9 = arith.constant 0 : index
    %26 = vector.load %arg7[%c0_8, %c0_9] : memref<2x128xf32, #tpu.memory_space<vmem>>, vector<2x128xf32>
    %cst_10 = arith.constant dense<0.000000e+00> : vector<2x128xf32>
    %27 = tpu.matmul %16, %25, %cst_10 {dimension_numbers = #tpu.dot_dimension_numbers<[1], [1], [0], [0], [0, 0, 1, 0], [], []>} : vector<2x256xf32>, vector<128x256xf32>, vector<2x128xf32> -> vector<2x128xf32>
    %28 = arith.addf %26, %27 : vector<2x128xf32>
    %c0_11 = arith.constant 0 : index
    %c0_12 = arith.constant 0 : index
    %29 = vector.load %arg7[%c0_11, %c0_12] : memref<2x128xf32, #tpu.memory_space<vmem>>, vector<2x128xf32>
    tpu.vector_store %arg7[%c0_11, %c0_12], %28 {strides = array<i32>} : memref<2x128xf32, #tpu.memory_space<vmem>>, vector<2x128xf32>,
    %c2_i32 = arith.constant 2 : i32
    %30 = arith.cmpi eq, %arg1, %c2_i32 : i32
    %31 = arith.extui %30 : i1 to i32
    %c0_i32_13 = arith.constant 0 : i32
    %32 = arith.cmpi ne, %31, %c0_i32_13 : i32
    scf.if %32 {
      %c0_14 = arith.constant 0 : index
      %c0_15 = arith.constant 0 : index
      %33 = vector.load %arg7[%c0_14, %c0_15] : memref<2x128xf32, #tpu.memory_space<vmem>>, vector<1x128xf32>
      %c1 = arith.constant 1 : index
      %c0_16 = arith.constant 0 : index
      %34 = vector.load %arg7[%c1, %c0_16] : memref<2x128xf32, #tpu.memory_space<vmem>>, vector<1x128xf32>
      %cst_17 = arith.constant 9.99999993E-9 : f32
      %35 = vector.broadcast %cst_17 : f32 to vector<1x128xf32>
      %36 = arith.maximumf %33, %35 : vector<1x128xf32>
      %37 = arith.divf %34, %36 : vector<1x128xf32>
      %cst_18 = arith.constant 1.000000e+00 : f32
      %38 = vector.broadcast %cst_18 : f32 to vector<1x128xf32>
      %39 = arith.subf %37, %38 : vector<1x128xf32>
      %40 = arith.mulf %39, %39 : vector<1x128xf32>
      %41 = arith.mulf %40, %40 : vector<1x128xf32>
      %42 = arith.mulf %41, %41 : vector<1x128xf32>
      %43 = arith.mulf %40, %42 : vector<1x128xf32>
      %cst_19 = arith.constant 1.000000e+00 : f32
      %44 = vector.broadcast %cst_19 : f32 to vector<1x128xf32>
      %45 = arith.addf %44, %43 : vector<1x128xf32>
      %cst_20 = arith.constant 0.000000e+00 : f32
      %46 = vector.broadcast %cst_20 : f32 to vector<1x128xf32>
      %47 = arith.maximumf %45, %46 : vector<1x128xf32>
      %cst_21 = arith.constant 9.99999993E-9 : f32
      %48 = vector.broadcast %cst_21 : f32 to vector<1x128xf32>
      %49 = arith.maximumf %47, %48 : vector<1x128xf32>
      %50 = math.log %49 : vector<1x128xf32>
      %c0_22 = arith.constant 0 : index
      %c0_23 = arith.constant 0 : index
      %51 = vector.load %arg6[%c0_22, %c0_23] : memref<1x128xf32, #tpu.memory_space<vmem>>, vector<1x128xf32>
      tpu.vector_store %arg6[%c0_22, %c0_23], %50 {strides = array<i32>} : memref<1x128xf32, #tpu.memory_space<vmem>>, vector<1x128xf32>,
    } else {
    }
    return
  }
  func.func @transform_0(%arg0: i32, %arg1: i32, %arg2: memref<1xf32, #tpu.memory_space<smem>>) -> (i32, i32) {
    %c0_i32 = arith.constant 0 : i32
    %c0_i32_0 = arith.constant 0 : i32
    return %c0_i32, %arg1 : i32, i32
  }
  func.func @transform_1(%arg0: i32, %arg1: i32, %arg2: memref<1xf32, #tpu.memory_space<smem>>) -> (i32, i32) {
    %c0_i32 = arith.constant 0 : i32
    %c0_i32_0 = arith.constant 0 : i32
    return %c0_i32, %arg1 : i32, i32
  }
  func.func @transform_2(%arg0: i32, %arg1: i32, %arg2: memref<1xf32, #tpu.memory_space<smem>>) -> (i32, i32) {
    %c0_i32 = arith.constant 0 : i32
    %c0_i32_0 = arith.constant 0 : i32
    return %c0_i32, %arg1 : i32, i32
  }
  func.func @transform_3(%arg0: i32, %arg1: i32, %arg2: memref<1xf32, #tpu.memory_space<smem>>) -> (i32, i32) {
    %c0_i32 = arith.constant 0 : i32
    %c0_i32_0 = arith.constant 0 : i32
    return %c0_i32, %arg0 : i32, i32
  }
}

</mosaic_0001>

<llo_original>
// kernel: tpu_custom_call.1
$region0: #{tpu_custom_call.1}
  #allocation0 [shape = 'u32[]', space=smem, size = 0x4, offset = 0x4, fixed_abs, tag = 'smem constant byte address 0x4 - core index']
  #allocation1 [shape = 'u32[144,128]{1,0:T(1,128)}', space=vmem, size = 0x12000, scoped, tag = 'internal scratch']
  #allocation2 [shape = 'f32[2,128]{1,0:T(2,128)}', space=vmem, size = 0x400, scoped, tag = 'scratch operand']
  #allocation3 [shape = 's32[1]{0}', space=sflag, size = 0x4, scoped, tag = 'scoped memory for tpu_custom_call.1']
  #allocation4 [shape = 'f32[1]{0:T(128)S(6)}', space=smem, size = 0x200, scoped, tag = 'prefetched SMEM operand 0']
  %s0 = inlined_call_operand.<no memory space> [shape: f32[1], index: 0, kind: input, shape index: {}]
  %s1 = inlined_call_operand.hbm [shape: f32[1,768], index: 1, kind: input, shape index: {}]
  %s2 = inlined_call_operand.vmem [shape: f32[1,768], index: 2, kind: input, shape index: {}]
  %s3 = inlined_call_operand.hbm [shape: s32[1,768], index: 3, kind: input, shape index: {}]
  %s4 = inlined_call_operand.hbm [shape: f32[1,256], index: 4, kind: output, shape index: {}]
  %s5 = sld [smem:[#allocation0]]
  $region61: #{tpu_custom_call.1} parent=0
    _
  %s7 = ssub.s32 1, %s5
  %s8 = scalar_select 0, %s7, %s5
  %9 = sst [smem:[#allocation4]] %s0
  $region1: #{tpu_custom_call.1} parent=0
    #allocation5 [shape = 'u8[2048]{0}', space=vmem, size = 0x800, scoped, tag = 'input window, operand 1']
    #allocation6 [shape = 's32[2]{0}', space=sflag, size = 0x8, scoped, tag = 'scoped memory for tpu_custom_call.1']
    #allocation7 [shape = 's32[2]{0}', space=sflag, size = 0x8, scoped, tag = 'scoped memory for tpu_custom_call.1']
    #allocation8 [shape = 'u8[2048]{0}', space=vmem, size = 0x800, scoped, tag = 'input window, operand 3']
    #allocation9 [shape = 's32[2]{0}', space=sflag, size = 0x8, scoped, tag = 'scoped memory for tpu_custom_call.1']
    #allocation10 [shape = 'u8[1024]{0}', space=vmem, size = 0x400, scoped, tag = 'output window, operand 0']
    %10 = vsyncpa [#allocation6], 0
    %s11 = scalar_lea.sflag [#allocation6], 1
    %12 = vsyncpa %s11, 0
    %13 = vsyncpa [#allocation9], 0
    %s14 = scalar_lea.sflag [#allocation9], 1
    %15 = vsyncpa %s14, 0
    %16 = vsyncpa [#allocation7], 0
    %s17 = scalar_lea.sflag [#allocation7], 1
    %18 = vsyncpa %s17, 0
    loop: start=0, step=1, limit=8
    $region2: #{tpu_custom_call.1} parent=1 // loop_pre_header
      _
    $region3: #{tpu_custom_call.1} parent=1 // loop_header
      %s20 = sphi 0, %s24
      %p21 = scmp.ge.s32.totalorder %s20, 8
      %s27 = sphi 0, %s39
      %s28 = sphi 0, %s35
      %s29 = sphi 0, %s27
      %s30 = sphi 0, %s28
      %s31 = sphi 0, %s29
      %s32 = sphi 0, %s30
      %s42 = sphi 0, %s44
      %s45 = sphi 0, %s42
      %s46 = sphi 0, %s45
      %s62 = sphi 0, %s46
      %s68 = sphi 0, %s70
      %s71 = sphi 0, %s68
      %s72 = sphi 0, %s71
      %s88 = sphi 0, %s72
      %s94 = sphi 0, %s96
      %s97 = sphi 0, %s94
      %s98 = sphi 0, %s97
      %s114 = sphi 0, %s98
      %s120 = sphi 0, %s122
      %s123 = sphi 0, %s120
      %s124 = sphi 0, %s123
      %s140 = sphi 0, %s124
    $region4: #{tpu_custom_call.1} parent=1 // loop_header_branch
      %23 = sbr.rel (%p21) target = $region8
    $region5: #{tpu_custom_call.1} parent=1 // loop_body
      %s25 = ssub.s32 %s20, 1
      %s26 = ssub.s32 %s20, 2
      %s33 = sadd.s32 1, %s28
      %p34 = scmp.ge.s32.totalorder %s33, 3
      %s35 = scalar_select %p34, 0, %s33
      %s36 = sadd.s32 1, %s27
      %s37 = scalar_select %p34, %s36, %s27
      %p38 = scmp.ge.s32.totalorder %s37, 2
      %s39 = scalar_select %p38, 0, %s37
      %s40 = ssub.s32 %s28, %s35
      %p41 = scmp.eq.s32.totalorder %s40, 0
      %s43 = sadd.s32 %s42, 1
      %s44 = scalar_select %p41, %s42, %s43
      %p47 = pneg %p41
      %p48 = scmp.eq.s32.totalorder %s20, 5
      %p49 = por %p47, %p48
      %p50 = scmp.ne.s32.totalorder %s42, %s45
      %p51 = scmp.eq.s32.totalorder %s20, 0
      %p52 = por %p50, %p51
      %p53 = scmp.ne.s32.totalorder %s42, %s45
      %p54 = scmp.eq.s32.totalorder %s25, 5
      %p55 = por %p53, %p54
      %p56 = scmp.ne.s32.totalorder %s45, %s46
      %p57 = scmp.eq.s32.totalorder %s25, 0
      %p58 = por %p56, %p57
      %p59 = scmp.ne.s32.totalorder %s45, %s46
      %p60 = scmp.eq.s32.totalorder %s26, 5
      %p61 = por %p59, %p60
      %p63 = scmp.ne.s32.totalorder %s46, %s62
      %p64 = scmp.eq.s32.totalorder %s26, 0
      %p65 = por %p63, %p64
      %s66 = ssub.s32 %s28, %s35
      %p67 = scmp.eq.s32.totalorder %s66, 0
      %s69 = sadd.s32 %s68, 1
      %s70 = scalar_select %p67, %s68, %s69
      %p73 = pneg %p67
      %p74 = scmp.eq.s32.totalorder %s20, 5
      %p75 = por %p73, %p74
      %p76 = scmp.ne.s32.totalorder %s68, %s71
      %p77 = scmp.eq.s32.totalorder %s20, 0
      %p78 = por %p76, %p77
      %p79 = scmp.ne.s32.totalorder %s68, %s71
      %p80 = scmp.eq.s32.totalorder %s25, 5
      %p81 = por %p79, %p80
      %p82 = scmp.ne.s32.totalorder %s71, %s72
      %p83 = scmp.eq.s32.totalorder %s25, 0
      %p84 = por %p82, %p83
      %p85 = scmp.ne.s32.totalorder %s71, %s72
      %p86 = scmp.eq.s32.totalorder %s26, 5
      %p87 = por %p85, %p86
      %p89 = scmp.ne.s32.totalorder %s72, %s88
      %p90 = scmp.eq.s32.totalorder %s26, 0
      %p91 = por %p89, %p90
      %s92 = ssub.s32 %s28, %s35
      %p93 = scmp.eq.s32.totalorder %s92, 0
      %s95 = sadd.s32 %s94, 1
      %s96 = scalar_select %p93, %s94, %s95
      %p99 = pneg %p93
      %p100 = scmp.eq.s32.totalorder %s20, 5
      %p101 = por %p99, %p100
      %p102 = scmp.ne.s32.totalorder %s94, %s97
      %p103 = scmp.eq.s32.totalorder %s20, 0
      %p104 = por %p102, %p103
      %p105 = scmp.ne.s32.totalorder %s94, %s97
      %p106 = scmp.eq.s32.totalorder %s25, 5
      %p107 = por %p105, %p106
      %p108 = scmp.ne.s32.totalorder %s97, %s98
      %p109 = scmp.eq.s32.totalorder %s25, 0
      %p110 = por %p108, %p109
      %p111 = scmp.ne.s32.totalorder %s97, %s98
      %p112 = scmp.eq.s32.totalorder %s26, 5
      %p113 = por %p111, %p112
      %p115 = scmp.ne.s32.totalorder %s98, %s114
      %p116 = scmp.eq.s32.totalorder %s26, 0
      %p117 = por %p115, %p116
      %s118 = ssub.s32 %s27, %s39
      %p119 = scmp.eq.s32.totalorder %s118, 0
      %s121 = sadd.s32 %s120, 1
      %s122 = scalar_select %p119, %s120, %s121
      %p125 = pneg %p119
      %p126 = scmp.eq.s32.totalorder %s20, 5
      %p127 = por %p125, %p126
      %p128 = scmp.ne.s32.totalorder %s120, %s123
      %p129 = scmp.eq.s32.totalorder %s20, 0
      %p130 = por %p128, %p129
      %p131 = scmp.ne.s32.totalorder %s120, %s123
      %p132 = scmp.eq.s32.totalorder %s25, 5
      %p133 = por %p131, %p132
      %p134 = scmp.ne.s32.totalorder %s123, %s124
      %p135 = scmp.eq.s32.totalorder %s25, 0
      %p136 = por %p134, %p135
      %p137 = scmp.ne.s32.totalorder %s123, %s124
      %p138 = scmp.eq.s32.totalorder %s26, 5
      %p139 = por %p137, %p138
      %p141 = scmp.ne.s32.totalorder %s124, %s140
      %p142 = scmp.eq.s32.totalorder %s26, 0
      %p143 = por %p141, %p142
      %p144 = scmp.le.s32.totalorder 1, %s20
      %p145 = scmp.lt.s32.totalorder %s20, 7
      %p146 = pnand %p144, %p145
      %p147 = pneg %p146
      // Predicated region
      $region9: #{tpu_custom_call.1} parent=5 // pred_check
        _
      $region10: #{tpu_custom_call.1} parent=5 // pred_check_branch
        %149 = sbr.rel (%p146) target = $region12
      $region11: #{tpu_custom_call.1} parent=5 // pred_region
        %s150 = ssub.s32 %s20, 1
      $region12: #{tpu_custom_call.1} parent=5 // pred_fallthru
        _
      %p151 = scmp.lt.s32.totalorder %s20, 6
      // Predicated region
      $region13: #{tpu_custom_call.1} parent=5 // pred_check
        %p152 = pneg %p151
      $region14: #{tpu_custom_call.1} parent=5 // pred_check_branch
        %154 = sbr.rel (%p152) target = $region16
      $region15: #{tpu_custom_call.1} parent=5 // pred_region
        // Predicated region
        $region17: #{tpu_custom_call.1} parent=15 // pred_check
          %p155 = pneg %p52
        $region18: #{tpu_custom_call.1} parent=15 // pred_check_branch
          %157 = sbr.rel (%p155) target = $region20
        $region19: #{tpu_custom_call.1} parent=15 // pred_region
          %s158 = sand.u32 %s42, 1
          %s159 = scalar_lea.sflag [#allocation6], %s158
          %s160 = sand.u32 %s42, 1
          %s161 = smul.addr %s160, 2
          %s162 = scalar_lea.vmem [#allocation5], %s161
          %s163 = smul.u32 2, %s28
          %s165 = ssub.s32 32, 32
          %166 = vsyncadd %s159, %s165
          %s167 = smul.addr %s163, 16
          %s168 = scalar_lea.hbm %s1, %s167
          %s170 = sshll.u32 %s162, 4
          %s171 = int_to_ptr.vmem [resolvable:$true] %s170
          %173 = dma.hbm_to_vmem [thread:$0]  %s168, 32, %s171, %s159
        $region20: #{tpu_custom_call.1} parent=15 // pred_fallthru
          _
        // Predicated region
        $region21: #{tpu_custom_call.1} parent=15 // pred_check
          %p174 = pneg %p78
        $region22: #{tpu_custom_call.1} parent=15 // pred_check_branch
          %176 = sbr.rel (%p174) target = $region24
        $region23: #{tpu_custom_call.1} parent=15 // pred_region
          %s177 = smul.u32 2, %s28
          %p178 = scmp.lt.s32.totalorder %s177, 5
          %s179 = scalar_select %p178, %s177, 5
          %s180 = scalar_lea.vmem %s2, %s179
          %s181 = smul.u32 2, %s28
        $region24: #{tpu_custom_call.1} parent=15 // pred_fallthru
          _
        // Predicated region
        $region25: #{tpu_custom_call.1} parent=15 // pred_check
          %p182 = pneg %p104
        $region26: #{tpu_custom_call.1} parent=15 // pred_check_branch
          %184 = sbr.rel (%p182) target = $region28
        $region27: #{tpu_custom_call.1} parent=15 // pred_region
          %s185 = sand.u32 %s94, 1
          %s186 = scalar_lea.sflag [#allocation9], %s185
          %s187 = sand.u32 %s94, 1
          %s188 = smul.addr %s187, 2
          %s189 = scalar_lea.vmem [#allocation8], %s188
          %s190 = smul.u32 2, %s28
          %s192 = ssub.s32 32, 32
          %193 = vsyncadd %s186, %s192
          %s194 = smul.addr %s190, 16
          %s195 = scalar_lea.hbm %s3, %s194
          %s197 = sshll.u32 %s189, 4
          %s198 = int_to_ptr.vmem [resolvable:$true] %s197
          %200 = dma.hbm_to_vmem [thread:$0]  %s195, 32, %s198, %s186
        $region28: #{tpu_custom_call.1} parent=15 // pred_fallthru
          _
      $region16: #{tpu_custom_call.1} parent=5 // pred_fallthru
        _
      %p201 = scmp.le.s32.totalorder 1, %s20
      %p202 = scmp.lt.s32.totalorder %s20, 7
      %p203 = pnand %p201, %p202
      %p204 = pneg %p203
      // Predicated region
      $region29: #{tpu_custom_call.1} parent=5 // pred_check
        _
      $region30: #{tpu_custom_call.1} parent=5 // pred_check_branch
        %206 = sbr.rel (%p203) target = $region32
      $region31: #{tpu_custom_call.1} parent=5 // pred_region
        %s207 = ssub.s32 %s20, 1
        %s208 = sand.u32 %s45, 1
        %s209 = scalar_lea.sflag [#allocation6], %s208
        %s210 = sand.u32 %s45, 1
        %s211 = smul.addr %s210, 2
        %s212 = scalar_lea.vmem [#allocation5], %s211
        // Predicated region
        $region33: #{tpu_custom_call.1} parent=31 // pred_check
          %p213 = pneg %p58
        $region34: #{tpu_custom_call.1} parent=31 // pred_check_branch
          %215 = sbr.rel (%p213) target = $region36
        $region35: #{tpu_custom_call.1} parent=31 // pred_region
          %216 = dma.done %s209, 32
        $region36: #{tpu_custom_call.1} parent=31 // pred_fallthru
          _
        %s217 = sand.u32 %s97, 1
        %s218 = scalar_lea.sflag [#allocation9], %s217
        %s219 = sand.u32 %s97, 1
        %s220 = smul.addr %s219, 2
        %s221 = scalar_lea.vmem [#allocation8], %s220
        // Predicated region
        $region37: #{tpu_custom_call.1} parent=31 // pred_check
          %p222 = pneg %p110
        $region38: #{tpu_custom_call.1} parent=31 // pred_check_branch
          %224 = sbr.rel (%p222) target = $region40
        $region39: #{tpu_custom_call.1} parent=31 // pred_region
          %225 = dma.done %s218, 32
        $region40: #{tpu_custom_call.1} parent=31 // pred_fallthru
          _
        %s226 = sand.u32 %s45, 1
        %s227 = scalar_lea.sflag [#allocation6], %s226
        %s228 = sand.u32 %s45, 1
        %s229 = smul.addr %s228, 2
        %s230 = scalar_lea.vmem [#allocation5], %s229
        %p231 = pneg %p58
        %p232 = pneg %p55
        %s233 = smul.u32 2, %s30
        %p234 = scmp.lt.s32.totalorder %s233, 5
        %s235 = scalar_select %p234, %s233, 5
        %s236 = scalar_lea.vmem %s2, %s235
        %p237 = pneg %p84
        %p238 = pneg %p81
        %s239 = sand.u32 %s97, 1
        %s240 = scalar_lea.sflag [#allocation9], %s239
        %s241 = sand.u32 %s97, 1
        %s242 = smul.addr %s241, 2
        %s243 = scalar_lea.vmem [#allocation8], %s242
        %p244 = pneg %p110
        %p245 = pneg %p107
        %p246 = pneg %p136
        %p247 = pneg %p133
        %s248 = sand.u32 %s123, 1
        %s249 = scalar_lea.sflag [#allocation7], %s248
        %s250 = sand.u32 %s123, 1
        %s251 = scalar_lea.vmem [#allocation10], %s250
        %s252 = smul.u32 2, %s30
        %s253 = smul.u32 2, %s30
        %p254 = scmp.lt.s32.totalorder %s253, 5
        %s255 = scalar_select %p254, %s253, 5
        %s256 = scalar_lea.vmem %s2, %s255
        %s257 = smul.u32 2, %s30
        %s258 = smul.u32 2, %s30
        %p259 = scmp.eq.s32.totalorder %s30, 0
        // Predicated region
        $region41: #{tpu_custom_call.1} parent=31 // pred_check
          %p260 = pneg %p259
        $region42: #{tpu_custom_call.1} parent=31 // pred_check_branch
          %262 = sbr.rel (%p260) target = $region44
        $region43: #{tpu_custom_call.1} parent=31 // pred_region
          %263 = vst [vmem:[#allocation2] sm:$0x3] 0.0
        $region44: #{tpu_custom_call.1} parent=31 // pred_fallthru
          _
        %s264 = sld [smem:[#allocation4]]
        %v265 = vld [vmem:[%s256] sm:$0x3]
        %v266 = vld [vmem:[%s212] sm:$0x3]
        %v267 = vmul.f32 %v265, %v266
        %v268 = vsub.f32 1.0, %v265
        %v269 = vmul.f32 %v268, 0.5
        %v270 = vadd.f32 %v267, %v269
        %v271 = vstv %s264
        %v272 = vmul.f32 %v271, %v270
        %v273 = vmul.f32 %v272, 1.442695
        %v274 = vpow.pop %v273
        %v275 = vmul.f32 %v274, %v270
        %v277 = vlaneseq
        %v278 = vshrl.u32 %v277, 7
        %v279 = vsub.s32 0, %v278
        %v280 = vrot.slane %v275, %v279
        %v281 = vlaneseq
        %v282 = vshrl.u32 %v281, 7
        %v283 = vsub.s32 1, %v282
        %v284 = vrot.slane %v275, %v283
        %v288 = vlaneseq
        %v289 = vshrl.u32 %v288, 7
        %v290 = vsub.s32 0, %v289
        %v291 = vrot.slane %v274, %v290
        %v292 = vlaneseq
        %v293 = vshrl.u32 %v292, 7
        %v294 = vsub.s32 1, %v293
        %v295 = vrot.slane %v274, %v294
        %vm298 = vcmask 1040384
        %v299 = vsel %vm298, %v280, %v291
        %v300 = vsel %vm298, %v284, %v295
        %v301 = vld [vmem:[%s221] sm:$0x3]
        %s302 = smul.u32 %s29, 128
        %v303 = vstv %s302
        %v304 = vsub.s32 %v301, %v303
        %v305 = vlaneseq
        %v306 = vshrl.u32 %v305, 7
        %v307 = vadd.s32 %v306, 8
        %v308 = vadd.s32 %v306, 16
        %v309 = vadd.s32 %v306, 24
        %v310 = vadd.s32 %v306, 32
        %v311 = vadd.s32 %v306, 40
        %v312 = vadd.s32 %v306, 48
        %v313 = vadd.s32 %v306, 56
        %v314 = vadd.s32 %v306, 64
        %v315 = vadd.s32 %v306, 72
        %v316 = vadd.s32 %v306, 80
        %v317 = vadd.s32 %v306, 88
        %v318 = vadd.s32 %v306, 96
        %v319 = vadd.s32 %v306, 104
        %v320 = vadd.s32 %v306, 112
        %v321 = vadd.s32 %v306, 120
        %v322 = vlaneseq
        %v323 = vshrl.u32 %v322, 7
        %v324 = vsub.s32 0, %v323
        %v325 = vrot.slane %v304, %v324
        %v326 = vlaneseq
        %v327 = vshrl.u32 %v326, 7
        %v328 = vsub.s32 1, %v327
        %v329 = vrot.slane %v304, %v328
        %vm330 = vcmp.eq.s32.totalorder %v306, %v325
        %vm331 = vcmp.eq.s32.totalorder %v306, %v329
        %vm332 = vcmp.eq.s32.totalorder %v307, %v325
        %vm333 = vcmp.eq.s32.totalorder %v307, %v329
        %vm334 = vcmp.eq.s32.totalorder %v308, %v325
        %vm335 = vcmp.eq.s32.totalorder %v308, %v329
        %vm336 = vcmp.eq.s32.totalorder %v309, %v325
        %vm337 = vcmp.eq.s32.totalorder %v309, %v329
        %vm338 = vcmp.eq.s32.totalorder %v310, %v325
        %vm339 = vcmp.eq.s32.totalorder %v310, %v329
        %vm340 = vcmp.eq.s32.totalorder %v311, %v325
        %vm341 = vcmp.eq.s32.totalorder %v311, %v329
        %vm342 = vcmp.eq.s32.totalorder %v312, %v325
        %vm343 = vcmp.eq.s32.totalorder %v312, %v329
        %vm344 = vcmp.eq.s32.totalorder %v313, %v325
        %vm345 = vcmp.eq.s32.totalorder %v313, %v329
        %vm346 = vcmp.eq.s32.totalorder %v314, %v325
        %vm347 = vcmp.eq.s32.totalorder %v314, %v329
        %vm348 = vcmp.eq.s32.totalorder %v315, %v325
        %vm349 = vcmp.eq.s32.totalorder %v315, %v329
        %vm350 = vcmp.eq.s32.totalorder %v316, %v325
        %vm351 = vcmp.eq.s32.totalorder %v316, %v329
        %vm352 = vcmp.eq.s32.totalorder %v317, %v325
        %vm353 = vcmp.eq.s32.totalorder %v317, %v329
        %vm354 = vcmp.eq.s32.totalorder %v318, %v325
        %vm355 = vcmp.eq.s32.totalorder %v318, %v329
        %vm356 = vcmp.eq.s32.totalorder %v319, %v325
        %vm357 = vcmp.eq.s32.totalorder %v319, %v329
        %vm358 = vcmp.eq.s32.totalorder %v320, %v325
        %vm359 = vcmp.eq.s32.totalorder %v320, %v329
        %vm360 = vcmp.eq.s32.totalorder %v321, %v325
        %vm361 = vcmp.eq.s32.totalorder %v321, %v329
        %v362 = vsel %vm330, 1, 0
        %v363 = vsel %vm331, 1, 0
        %v364 = vsel %vm332, 1, 0
        %v365 = vsel %vm333, 1, 0
        %v366 = vsel %vm334, 1, 0
        %v367 = vsel %vm335, 1, 0
        %v368 = vsel %vm336, 1, 0
        %v369 = vsel %vm337, 1, 0
        %v370 = vsel %vm338, 1, 0
        %v371 = vsel %vm339, 1, 0
        %v372 = vsel %vm340, 1, 0
        %v373 = vsel %vm341, 1, 0
        %v374 = vsel %vm342, 1, 0
        %v375 = vsel %vm343, 1, 0
        %v376 = vsel %vm344, 1, 0
        %v377 = vsel %vm345, 1, 0
        %v378 = vsel %vm346, 1, 0
        %v379 = vsel %vm347, 1, 0
        %v380 = vsel %vm348, 1, 0
        %v381 = vsel %vm349, 1, 0
        %v382 = vsel %vm350, 1, 0
        %v383 = vsel %vm351, 1, 0
        %v384 = vsel %vm352, 1, 0
        %v385 = vsel %vm353, 1, 0
        %v386 = vsel %vm354, 1, 0
        %v387 = vsel %vm355, 1, 0
        %v388 = vsel %vm356, 1, 0
        %v389 = vsel %vm357, 1, 0
        %v390 = vsel %vm358, 1, 0
        %v391 = vsel %vm359, 1, 0
        %v392 = vsel %vm360, 1, 0
        %v393 = vsel %vm361, 1, 0
        %v394 = vcvt.s32.f32 %v362
        %v395 = vcvt.s32.f32 %v363
        %v396 = vcvt.s32.f32 %v364
        %v397 = vcvt.s32.f32 %v365
        %v398 = vcvt.s32.f32 %v366
        %v399 = vcvt.s32.f32 %v367
        %v400 = vcvt.s32.f32 %v368
        %v401 = vcvt.s32.f32 %v369
        %v402 = vcvt.s32.f32 %v370
        %v403 = vcvt.s32.f32 %v371
        %v404 = vcvt.s32.f32 %v372
        %v405 = vcvt.s32.f32 %v373
        %v406 = vcvt.s32.f32 %v374
        %v407 = vcvt.s32.f32 %v375
        %v408 = vcvt.s32.f32 %v376
        %v409 = vcvt.s32.f32 %v377
        %v410 = vcvt.s32.f32 %v378
        %v411 = vcvt.s32.f32 %v379
        %v412 = vcvt.s32.f32 %v380
        %v413 = vcvt.s32.f32 %v381
        %v414 = vcvt.s32.f32 %v382
        %v415 = vcvt.s32.f32 %v383
        %v416 = vcvt.s32.f32 %v384
        %v417 = vcvt.s32.f32 %v385
        %v418 = vcvt.s32.f32 %v386
        %v419 = vcvt.s32.f32 %v387
        %v420 = vcvt.s32.f32 %v388
        %v421 = vcvt.s32.f32 %v389
        %v422 = vcvt.s32.f32 %v390
        %v423 = vcvt.s32.f32 %v391
        %v424 = vcvt.s32.f32 %v392
        %v425 = vcvt.s32.f32 %v393
        %v426 = vld [vmem:[#allocation2] sm:$0x3]
        %427 = vmatprep.subr.mxu0 %v395
        %428 = vmatpush1.xpose.msra.mxu0 %v394
        %429 = vmatprep.subr.mxu0 %v397
        %430 = vmatpush1.xpose.msra.mxu0 %v396
        %431 = vmatprep.subr.mxu0 %v399
        %432 = vmatpush1.xpose.msra.mxu0 %v398
        %433 = vmatprep.subr.mxu0 %v401
        %434 = vmatpush1.xpose.msra.mxu0 %v400
        %435 = vmatprep.subr.mxu0 %v403
        %436 = vmatpush1.xpose.msra.mxu0 %v402
        %437 = vmatprep.subr.mxu0 %v405
        %438 = vmatpush1.xpose.msra.mxu0 %v404
        %439 = vmatprep.subr.mxu0 %v407
        %440 = vmatpush1.xpose.msra.mxu0 %v406
        %441 = vmatprep.subr.mxu0 %v409
        %442 = vmatpush1.xpose.msra.mxu0 %v408
        %443 = vmatprep.subr.mxu0 %v411
        %444 = vmatpush1.xpose.msra.mxu0 %v410
        %445 = vmatprep.subr.mxu0 %v413
        %446 = vmatpush1.xpose.msra.mxu0 %v412
        %447 = vmatprep.subr.mxu0 %v415
        %448 = vmatpush1.xpose.msra.mxu0 %v414
        %449 = vmatprep.subr.mxu0 %v417
        %450 = vmatpush1.xpose.msra.mxu0 %v416
        %451 = vmatprep.subr.mxu0 %v419
        %452 = vmatpush1.xpose.msra.mxu0 %v418
        %453 = vmatprep.subr.mxu0 %v421
        %454 = vmatpush1.xpose.msra.mxu0 %v420
        %455 = vmatprep.subr.mxu0 %v423
        %456 = vmatpush1.xpose.msra.mxu0 %v422
        %457 = vmatprep.subr.mxu0 %v425
        %458 = vmatpush1.xpose.msra.mxu0 %v424
        %459 = vmatprep.subr.mxu0 0.0
        %460 = vmatpush1.xpose.msra.mxu0 0.0
        %461 = vmatprep.subr.mxu0 0.0
        %462 = vmatpush1.xpose.msra.mxu0 0.0
        %463 = vmatprep.subr.mxu0 0.0
        %464 = vmatpush1.xpose.msra.mxu0 0.0
        %465 = vmatprep.subr.mxu0 0.0
        %466 = vmatpush1.xpose.msra.mxu0 0.0
        %467 = vmatprep.subr.mxu0 0.0
        %468 = vmatpush1.xpose.msra.mxu0 0.0
        %469 = vmatprep.subr.mxu0 0.0
        %470 = vmatpush1.xpose.msra.mxu0 0.0
        %471 = vmatprep.subr.mxu0 0.0
        %472 = vmatpush1.xpose.msra.mxu0 0.0
        %473 = vmatprep.subr.mxu0 0.0
        %474 = vmatpush1.xpose.msra.mxu0 0.0
        %475 = vmatprep.subr.mxu0 0.0
        %476 = vmatpush1.xpose.msra.mxu0 0.0
        %477 = vmatprep.subr.mxu0 0.0
        %478 = vmatpush1.xpose.msra.mxu0 0.0
        %479 = vmatprep.subr.mxu0 0.0
        %480 = vmatpush1.xpose.msra.mxu0 0.0
        %481 = vmatprep.subr.mxu0 0.0
        %482 = vmatpush1.xpose.msra.mxu0 0.0
        %483 = vmatprep.subr.mxu0 0.0
        %484 = vmatpush1.xpose.msra.mxu0 0.0
        %485 = vmatprep.subr.mxu0 0.0
        %486 = vmatpush1.xpose.msra.mxu0 0.0
        %487 = vmatprep.subr.mxu0 0.0
        %488 = vmatpush1.xpose.msra.mxu0 0.0
        %489 = vmatprep.subr.mxu0 0.0
        %490 = vmatpush1.xpose.msra.mxu0 0.0
        %491 = vmatprep.mubr.f32.mxu0 %v300
        %492 = vmatmul.mubr.f32.gmra.mrb[0].mxu0 %v299
        %v493 = vpop.f32.mrb[0].mxu0
        %v494 = vadd.f32 0.0, %v493
        %v495 = vpop.f32.mrb[0].mxu0
        %496 = vdwg.mxu0
        %v497 = vadd.f32 %v426, %v494
        %498 = vst [vmem:[#allocation2] sm:$0x3] %v497
        %p499 = scmp.eq.s32.totalorder %s30, 2
        // Predicated region
        $region45: #{tpu_custom_call.1} parent=31 // pred_check
          %p500 = pneg %p499
        $region46: #{tpu_custom_call.1} parent=31 // pred_check_branch
          %502 = sbr.rel (%p500) target = $region48
        $region47: #{tpu_custom_call.1} parent=31 // pred_region
          %v503 = vld [vmem:[#allocation2] sm:$0x1]
          %v504 = vld [vmem:[#allocation2 + $0x1] sm:$0x1]
          %v505 = vmax.f32 %v503, 1e-08
          %v506 = vrcp.pop %v505
          %v507 = vmul.f32 %v504, %v506
          %v508 = vsub.f32 %v507, 1.0
          %v509 = vmul.f32 %v508, %v508
          %v510 = vmul.f32 %v509, %v509
          %v511 = vmul.f32 %v510, %v510
          %v512 = vmul.f32 %v509, %v511
          %v513 = vadd.f32 %v512, 1.0
          %v514 = vmax.f32 %v513, 0.0
          %v515 = vmax.f32 %v514, 1e-08
          %v516 = vlog2.pop %v515
          %v517 = vmul.f32 %v516, 0.6931472
          %518 = vst [vmem:[%s251] sm:$0x1] %v517
        $region48: #{tpu_custom_call.1} parent=31 // pred_fallthru
          _
        %s519 = sand.u32 %s123, 1
        %s520 = scalar_lea.sflag [#allocation7], %s519
        %s521 = sand.u32 %s123, 1
        %s522 = scalar_lea.vmem [#allocation10], %s521
        // Predicated region
        $region49: #{tpu_custom_call.1} parent=31 // pred_check
          %p523 = pneg %p133
        $region50: #{tpu_custom_call.1} parent=31 // pred_check_branch
          %525 = sbr.rel (%p523) target = $region52
        $region51: #{tpu_custom_call.1} parent=31 // pred_region
          %s527 = ssub.s32 16, 16
          %528 = vsyncadd %s520, %s527
          %s529 = smul.addr %s29, 16
          %s530 = scalar_lea.hbm %s4, %s529
          %s532 = sshll.u32 %s522, 4
          %s533 = int_to_ptr.vmem [resolvable:$true] %s532
          %535 = dma.vmem_to_hbm [thread:$0]  %s533, 16, %s530, %s520
        $region52: #{tpu_custom_call.1} parent=31 // pred_fallthru
          _
      $region32: #{tpu_custom_call.1} parent=5 // pred_fallthru
        _
      %p536 = scmp.le.s32.totalorder 2, %s20
      // Predicated region
      $region53: #{tpu_custom_call.1} parent=5 // pred_check
        %p537 = pneg %p536
      $region54: #{tpu_custom_call.1} parent=5 // pred_check_branch
        %539 = sbr.rel (%p537) target = $region56
      $region55: #{tpu_custom_call.1} parent=5 // pred_region
        %s540 = ssub.s32 %s20, 2
        // Predicated region
        $region57: #{tpu_custom_call.1} parent=55 // pred_check
          %p541 = pneg %p139
        $region58: #{tpu_custom_call.1} parent=55 // pred_check_branch
          %543 = sbr.rel (%p541) target = $region60
        $region59: #{tpu_custom_call.1} parent=55 // pred_region
          %s544 = sand.u32 %s124, 1
          %s545 = scalar_lea.sflag [#allocation7], %s544
          %s546 = sand.u32 %s124, 1
          %s547 = scalar_lea.vmem [#allocation10], %s546
          %548 = dma.done %s545, 16
        $region60: #{tpu_custom_call.1} parent=55 // pred_fallthru
          _
      $region56: #{tpu_custom_call.1} parent=5 // pred_fallthru
        _
    $region6: #{tpu_custom_call.1} parent=1 // loop_footer
      %s24 = sadd.s32 1, %s20
    $region7: #{tpu_custom_call.1} parent=1 // loop_footer_branch
      %19 = sbr.rel target = $region3
    $region8: #{tpu_custom_call.1} parent=1 // loop_exit
      _
    %549 = vsyncpa [#allocation6], 1
    %s550 = scalar_lea.sflag [#allocation6], 1
    %551 = vsyncpa %s550, 1
    %552 = vsyncpa [#allocation9], 1
    %s553 = scalar_lea.sflag [#allocation9], 1
    %554 = vsyncpa %s553, 1
    %555 = vsyncpa [#allocation7], 1
    %s556 = scalar_lea.sflag [#allocation7], 1
    %557 = vsyncpa %s556, 1

</llo_original>
